<compile_context>
chip_gen: v6e
topology: v6e:2x2x1
jax: 0.10.0
libtpu: 0.0.40
codegen_flags: <defaults>
</compile_context>

<pallas_src>
import functools

import jax
import jax.numpy as jnp
from jax.experimental import pallas as pl
from jax.experimental.pallas import tpu as pltpu


def _round_up(x, m):
    return ((x + m - 1) // m) * m


def actor_kernel(x_ref, w1_ref, w2_ref, w3_ref, b23_ref, out_ref, *,
                 state_dim, action_dim):
    x = x_ref[...]                                    # (TB, state_dim) f32

    # ---- fc1 + relu: K = state_dim is tiny -> VPU FMAs, skip the MXU.
    # w1_ref has shape (state_dim + 1, hidden); last row is the folded bias.
    h1 = w1_ref[state_dim:state_dim + 1, :]           # (1, H) bias row
    for k in range(state_dim):                        # static unroll (state_dim small)
        h1 = h1 + x[:, k:k + 1] * w1_ref[k:k + 1, :]  # (TB,1)*(1,H) -> (TB,H)
    h1 = jnp.maximum(h1, 0.0)

    # ---- fc2 + relu: the only non-degenerate (HxH) contraction -> MXU.
    # TODO(synk): optionally cast h1/w2 to bfloat16 on v6e/v7x for full-rate MXU
    # (keep preferred_element_type=f32); kept f32 here to match the reference.
    h2 = jnp.dot(h1, w2_ref[...], preferred_element_type=jnp.float32)
    h2 = jnp.maximum(h2 + b23_ref[0:1, :], 0.0)

    # ---- fc3 + numerically-stable softmax over the last axis.
    logits = jnp.dot(h2, w3_ref[...], preferred_element_type=jnp.float32)
    logits = logits + b23_ref[1:2, 0:action_dim]
    m = jnp.max(logits, axis=-1, keepdims=True)
    e = jnp.exp(logits - m)
    denom = jnp.sum(e, axis=-1, keepdims=True)
    inv = pl.reciprocal(denom, approx=True)           # EUP slot, off the VALU path
    out_ref[...] = (e * inv).astype(out_ref.dtype)


def actor_network_forward(state, params, *, block_b=256):
    """state: (B, state_dim) float32 -> action_probs: (B, action_dim) float32."""
    w1, b1, w2, b2, w3, b3 = params
    state_dim, hidden_dim = w1.shape
    action_dim = w3.shape[1]
    B = state.shape[0]

    # Fold b1 into w1 as an extra row; pack b2 and lane-padded b3 into one array.
    w1_aug = jnp.concatenate([w1, b1.reshape(1, hidden_dim)], axis=0)
    b3_pad = jnp.zeros((1, hidden_dim), jnp.float32).at[:, :action_dim].set(
        b3.reshape(1, action_dim))
    b23 = jnp.concatenate([b2.reshape(1, hidden_dim), b3_pad], axis=0)

    # Batch tile: multiple of 8 (f32 sublane).  block_b=256 keeps per-block VMEM
    # (double-buffered I/O + two (TB, hidden) f32 intermediates + ~260 KiB
    # resident weights) well under even v7x's 64 MiB / v5e's 16 MiB scoped default.
    tb = min(_round_up(block_b, 8), _round_up(B, 8))
    b_pad = _round_up(B, tb)
    if b_pad != B:
        state = jnp.pad(state, ((0, b_pad - B), (0, 0)))

    kernel = functools.partial(actor_kernel, state_dim=state_dim,
                               action_dim=action_dim)

    out = pl.pallas_call(
        kernel,
        out_shape=jax.ShapeDtypeStruct((b_pad, action_dim), jnp.float32),
        grid=(pl.cdiv(b_pad, tb),),
        in_specs=[
            pl.BlockSpec((tb, state_dim), lambda i: (i, 0)),     # streamed per block
            pl.BlockSpec(w1_aug.shape, lambda i: (0, 0)),        # VMEM-resident
            pl.BlockSpec(w2.shape, lambda i: (0, 0)),            # VMEM-resident
            pl.BlockSpec(w3.shape, lambda i: (0, 0)),            # VMEM-resident
            pl.BlockSpec(b23.shape, lambda i: (0, 0)),           # VMEM-resident
        ],
        out_specs=pl.BlockSpec((tb, action_dim), lambda i: (i, 0)),
        compiler_params=pltpu.CompilerParams(
            # Batch axis is embarrassingly parallel -> megacore sharding on v7x.
            dimension_semantics=("parallel",),
        ),
    )(state, w1_aug, w2, w3, b23)
    return out[:B]


def init_params(key, state_dim, action_dim, hidden_dim):
    """Deterministic synthetic parameters (shapes match nn.Linear layers)."""
    ks = jax.random.split(key, 6)
    scale = 0.1
    w1 = scale * jax.random.normal(ks[0], (state_dim, hidden_dim), jnp.float32)
    b1 = scale * jax.random.normal(ks[1], (1, hidden_dim), jnp.float32)
    w2 = scale * jax.random.normal(ks[2], (hidden_dim, hidden_dim), jnp.float32)
    b2 = scale * jax.random.normal(ks[3], (1, hidden_dim), jnp.float32)
    w3 = scale * jax.random.normal(ks[4], (hidden_dim, action_dim), jnp.float32)
    b3 = scale * jax.random.normal(ks[5], (1, action_dim), jnp.float32)
    return (w1, b1, w2, b2, w3, b3)


def reference_forward(state, params):
    """Pure-JAX reference for correctness checking."""
    w1, b1, w2, b2, w3, b3 = params
    h1 = jnp.maximum(state @ w1 + b1, 0.0)
    h2 = jnp.maximum(h1 @ w2 + b2, 0.0)
    logits = h2 @ w3 + b3
    return jax.nn.softmax(logits, axis=-1)


if __name__ == "__main__":
    # Env implies: state_dim = 2 (observation Box shape (2,)), action_dim = 2 (Discrete(2)).
    batch = 8
    state_dim = 2
    action_dim = 2
    hidden_dim = 256  # module default

    key = jax.random.PRNGKey(0)
    k_state, k_params = jax.random.split(key)
    state = jax.random.uniform(k_state, (batch, state_dim), jnp.float32, 0.0, 100.0)
    params = init_params(k_params, state_dim, action_dim, hidden_dim)

    probs = actor_network_forward(state, params)
    probs = jax.block_until_ready(probs)

    ref = reference_forward(state, params)
    assert probs.shape == (batch, action_dim)
    # approx reciprocal in the softmax epilogue -> slightly looser tolerance.
    assert jnp.allclose(probs, ref, atol=1e-3, rtol=1e-3), "mismatch vs reference"
    assert jnp.allclose(jnp.sum(probs, axis=-1), 1.0, atol=1e-3), "rows must sum to 1"

    print("KERNEL_OK")
</pallas_src>

<mosaic_0001>
module attributes {stable_mosaic.version = 11 : i64} {
  func.func @actor_kernel(%arg0: i32, %arg1: memref<8x2xf32, #tpu.memory_space<vmem>>, %arg2: memref<3x256xf32, #tpu.memory_space<vmem>>, %arg3: memref<256x256xf32, #tpu.memory_space<vmem>>, %arg4: memref<256x2xf32, #tpu.memory_space<vmem>>, %arg5: memref<2x256xf32, #tpu.memory_space<vmem>>, %arg6: memref<8x2xf32, #tpu.memory_space<vmem>>) attributes {dimension_semantics = [#tpu.dimension_semantics<parallel>], iteration_bounds = array<i64: 1>, scalar_prefetch = 0 : i64, scratch_operands = 0 : i64, tpu.core_type = #tpu.core_type<tc>, window_params = [{transform_indices = @transform_0, window_bounds = array<i64: 8, 2>}, {pipeline_mode = #tpu.pipeline_mode<synchronous>, transform_indices = @transform_1, window_bounds = array<i64: 3, 256>}, {pipeline_mode = #tpu.pipeline_mode<synchronous>, transform_indices = @transform_2, window_bounds = array<i64: 256, 256>}, {pipeline_mode = #tpu.pipeline_mode<synchronous>, transform_indices = @transform_3, window_bounds = array<i64: 256, 2>}, {pipeline_mode = #tpu.pipeline_mode<synchronous>, transform_indices = @transform_4, window_bounds = array<i64: 2, 256>}, {transform_indices = @transform_5, window_bounds = array<i64: 8, 2>}]} {
    %c0 = arith.constant 0 : index
    %c0_0 = arith.constant 0 : index
    %0 = vector.load %arg1[%c0, %c0_0] : memref<8x2xf32, #tpu.memory_space<vmem>>, vector<8x2xf32>
    %c2 = arith.constant 2 : index
    %c0_1 = arith.constant 0 : index
    %1 = vector.load %arg2[%c2, %c0_1] : memref<3x256xf32, #tpu.memory_space<vmem>>, vector<1x256xf32>
    %2 = vector.extract_strided_slice %0 {offsets = [0, 0], sizes = [8, 1], strides = [1, 1]} : vector<8x2xf32> to vector<8x1xf32>
    %c0_2 = arith.constant 0 : index
    %c0_3 = arith.constant 0 : index
    %3 = vector.load %arg2[%c0_2, %c0_3] : memref<3x256xf32, #tpu.memory_space<vmem>>, vector<1x256xf32>
    %4 = vector.broadcast %2 : vector<8x1xf32> to vector<8x256xf32>
    %5 = vector.broadcast %3 : vector<1x256xf32> to vector<8x256xf32>
    %6 = arith.mulf %4, %5 : vector<8x256xf32>
    %7 = vector.broadcast %1 : vector<1x256xf32> to vector<8x256xf32>
    %8 = arith.addf %7, %6 : vector<8x256xf32>
    %9 = vector.extract_strided_slice %0 {offsets = [0, 1], sizes = [8, 1], strides = [1, 1]} : vector<8x2xf32> to vector<8x1xf32>
    %c1 = arith.constant 1 : index
    %c0_4 = arith.constant 0 : index
    %10 = vector.load %arg2[%c1, %c0_4] : memref<3x256xf32, #tpu.memory_space<vmem>>, vector<1x256xf32>
    %11 = vector.broadcast %9 : vector<8x1xf32> to vector<8x256xf32>
    %12 = vector.broadcast %10 : vector<1x256xf32> to vector<8x256xf32>
    %13 = arith.mulf %11, %12 : vector<8x256xf32>
    %14 = arith.addf %8, %13 : vector<8x256xf32>
    %cst = arith.constant 0.000000e+00 : f32
    %15 = vector.broadcast %cst : f32 to vector<8x256xf32>
    %16 = arith.maximumf %14, %15 : vector<8x256xf32>
    %c0_5 = arith.constant 0 : index
    %c0_6 = arith.constant 0 : index
    %17 = vector.load %arg3[%c0_5, %c0_6] : memref<256x256xf32, #tpu.memory_space<vmem>>, vector<256x256xf32>
    %cst_7 = arith.constant dense<0.000000e+00> : vector<8x256xf32>
    %18 = tpu.matmul %16, %17, %cst_7 {dimension_numbers = #tpu.dot_dimension_numbers<[1], [0], [0], [1], [0, 0, 1, 1], [], []>} : vector<8x256xf32>, vector<256x256xf32>, vector<8x256xf32> -> vector<8x256xf32>
    %c0_8 = arith.constant 0 : index
    %c0_9 = arith.constant 0 : index
    %19 = vector.load %arg5[%c0_8, %c0_9] : memref<2x256xf32, #tpu.memory_space<vmem>>, vector<1x256xf32>
    %20 = vector.broadcast %19 : vector<1x256xf32> to vector<8x256xf32>
    %21 = arith.addf %18, %20 : vector<8x256xf32>
    %cst_10 = arith.constant 0.000000e+00 : f32
    %22 = vector.broadcast %cst_10 : f32 to vector<8x256xf32>
    %23 = arith.maximumf %21, %22 : vector<8x256xf32>
    %c0_11 = arith.constant 0 : index
    %c0_12 = arith.constant 0 : index
    %24 = vector.load %arg4[%c0_11, %c0_12] : memref<256x2xf32, #tpu.memory_space<vmem>>, vector<256x2xf32>
    %cst_13 = arith.constant dense<0.000000e+00> : vector<8x2xf32>
    %25 = tpu.matmul %23, %24, %cst_13 {dimension_numbers = #tpu.dot_dimension_numbers<[1], [0], [0], [1], [0, 0, 1, 1], [], []>} : vector<8x256xf32>, vector<256x2xf32>, vector<8x2xf32> -> vector<8x2xf32>
    %c1_14 = arith.constant 1 : index
    %c0_15 = arith.constant 0 : index
    %26 = vector.load %arg5[%c1_14, %c0_15] : memref<2x256xf32, #tpu.memory_space<vmem>>, vector<1x2xf32>
    %27 = vector.broadcast %26 : vector<1x2xf32> to vector<8x2xf32>
    %28 = arith.addf %25, %27 : vector<8x2xf32>
    %cst_16 = arith.constant dense<0xFF800000> : vector<8xf32>
    %29 = vector.multi_reduction <maximumf>, %28, %cst_16 [1] : vector<8x2xf32> to vector<8xf32>
    %30 = vector.shape_cast %29 : vector<8xf32> to vector<8x1xf32>
    %31 = vector.broadcast %30 : vector<8x1xf32> to vector<8x2xf32>
    %32 = arith.subf %28, %31 : vector<8x2xf32>
    %33 = math.exp %32 : vector<8x2xf32>
    %cst_17 = arith.constant dense<0.000000e+00> : vector<8xf32>
    %34 = vector.multi_reduction <add>, %33, %cst_17 [1] : vector<8x2xf32> to vector<8xf32>
    %35 = vector.shape_cast %34 : vector<8xf32> to vector<8x1xf32>
    %36 = tpu.reciprocal %35 {approx = true} : vector<8x1xf32> -> vector<8x1xf32>
    %37 = vector.broadcast %36 : vector<8x1xf32> to vector<8x2xf32>
    %38 = arith.mulf %33, %37 : vector<8x2xf32>
    %c0_18 = arith.constant 0 : index
    %c0_19 = arith.constant 0 : index
    %39 = vector.load %arg6[%c0_18, %c0_19] : memref<8x2xf32, #tpu.memory_space<vmem>>, vector<8x2xf32>
    tpu.vector_store %arg6[%c0_18, %c0_19], %38 {strides = array<i32>} : memref<8x2xf32, #tpu.memory_space<vmem>>, vector<8x2xf32>,
    return
  }
  func.func @transform_0(%arg0: i32) -> (i32, i32) {
    %c0_i32 = arith.constant 0 : i32
    %c0_i32_0 = arith.constant 0 : i32
    return %arg0, %c0_i32 : i32, i32
  }
  func.func @transform_1(%arg0: i32) -> (i32, i32) {
    %c0_i32 = arith.constant 0 : i32
    %c0_i32_0 = arith.constant 0 : i32
    %c0_i32_1 = arith.constant 0 : i32
    return %c0_i32, %c0_i32_0 : i32, i32
  }
  func.func @transform_2(%arg0: i32) -> (i32, i32) {
    %c0_i32 = arith.constant 0 : i32
    %c0_i32_0 = arith.constant 0 : i32
    %c0_i32_1 = arith.constant 0 : i32
    return %c0_i32, %c0_i32_0 : i32, i32
  }
  func.func @transform_3(%arg0: i32) -> (i32, i32) {
    %c0_i32 = arith.constant 0 : i32
    %c0_i32_0 = arith.constant 0 : i32
    %c0_i32_1 = arith.constant 0 : i32
    return %c0_i32, %c0_i32_0 : i32, i32
  }
  func.func @transform_4(%arg0: i32) -> (i32, i32) {
    %c0_i32 = arith.constant 0 : i32
    %c0_i32_0 = arith.constant 0 : i32
    %c0_i32_1 = arith.constant 0 : i32
    return %c0_i32, %c0_i32_0 : i32, i32
  }
  func.func @transform_5(%arg0: i32) -> (i32, i32) {
    %c0_i32 = arith.constant 0 : i32
    %c0_i32_0 = arith.constant 0 : i32
    return %arg0, %c0_i32 : i32, i32
  }
}

</mosaic_0001>

<llo_original>
// kernel: tpu_custom_call.1
$region0: #{tpu_custom_call.1}
  #allocation0 [shape = 'u32[]', space=smem, size = 0x4, offset = 0x4, fixed_abs, tag = 'smem constant byte address 0x4 - core index']
  #allocation1 [shape = 'u32[144,128]{1,0:T(1,128)}', space=vmem, size = 0x12000, scoped, tag = 'internal scratch']
  %s0 = inlined_call_operand.vmem [shape: f32[8,2], index: 0, kind: input, shape index: {}]
  %s1 = inlined_call_operand.vmem [shape: f32[3,256], index: 1, kind: input, shape index: {}]
  %s2 = inlined_call_operand.hbm [shape: f32[256,256], index: 2, kind: input, shape index: {}]
  %s3 = inlined_call_operand.vmem [shape: f32[256,2], index: 3, kind: input, shape index: {}]
  %s4 = inlined_call_operand.vmem [shape: f32[2,256], index: 4, kind: input, shape index: {}]
  %s5 = inlined_call_operand.vmem [shape: f32[8,2], index: 5, kind: output, shape index: {}]
  %s6 = sld [smem:[#allocation0]]
  $region34: #{tpu_custom_call.1} parent=0
    _
  %s8 = ssub.s32 1, %s6
  %s9 = scalar_select 0, %s8, %s6
  $region1: #{tpu_custom_call.1} parent=0
    #allocation2 [shape = 'u8[262144]{0}', space=vmem, size = 0x40000, scoped, tag = 'input window, operand 2, single buffered']
    #allocation3 [shape = 's32[1]{0}', space=sflag, size = 0x4, scoped, tag = 'scoped memory for tpu_custom_call.1']
    %10 = vsyncpa [#allocation3], 0
    // Predicated region
    $region2: #{tpu_custom_call.1} parent=1 // pred_check
      _
    $region3: #{tpu_custom_call.1} parent=1 // pred_check_branch
      %12 = sbr.rel (0) target = $region5
    $region4: #{tpu_custom_call.1} parent=1 // pred_region
      _
    $region5: #{tpu_custom_call.1} parent=1 // pred_fallthru
      _
    // Predicated region
    $region6: #{tpu_custom_call.1} parent=1 // pred_check
      _
    $region7: #{tpu_custom_call.1} parent=1 // pred_check_branch
      %14 = sbr.rel (0) target = $region9
    $region8: #{tpu_custom_call.1} parent=1 // pred_region
      _
    $region9: #{tpu_custom_call.1} parent=1 // pred_fallthru
      _
    // Predicated region
    $region10: #{tpu_custom_call.1} parent=1 // pred_check
      _
    $region11: #{tpu_custom_call.1} parent=1 // pred_check_branch
      %16 = sbr.rel (0) target = $region13
    $region12: #{tpu_custom_call.1} parent=1 // pred_region
      %s18 = ssub.s32 8192, 8192
      %19 = vsyncadd [#allocation3], %s18
      %s20 = sshll.u32 [#allocation2], 4
      %s21 = int_to_ptr.vmem [resolvable:$true] %s20
      %26 = dma.hbm_to_vmem [thread:$0]  %s2, 8192, %s21, [#allocation3], 256, 256, 16
    $region13: #{tpu_custom_call.1} parent=1 // pred_fallthru
      _
    // Predicated region
    $region14: #{tpu_custom_call.1} parent=1 // pred_check
      _
    $region15: #{tpu_custom_call.1} parent=1 // pred_check_branch
      %28 = sbr.rel (0) target = $region17
    $region16: #{tpu_custom_call.1} parent=1 // pred_region
      _
    $region17: #{tpu_custom_call.1} parent=1 // pred_fallthru
      _
    // Predicated region
    $region18: #{tpu_custom_call.1} parent=1 // pred_check
      _
    $region19: #{tpu_custom_call.1} parent=1 // pred_check_branch
      %30 = sbr.rel (0) target = $region21
    $region20: #{tpu_custom_call.1} parent=1 // pred_region
      _
    $region21: #{tpu_custom_call.1} parent=1 // pred_fallthru
      _
    // Predicated region
    $region22: #{tpu_custom_call.1} parent=1 // pred_check
      _
    $region23: #{tpu_custom_call.1} parent=1 // pred_check_branch
      %32 = sbr.rel (0) target = $region25
    $region24: #{tpu_custom_call.1} parent=1 // pred_region
      %33 = dma.done [#allocation3], 8192
    $region25: #{tpu_custom_call.1} parent=1 // pred_fallthru
      _
    %v34 = vld [vmem:[%s0] sm:$0xff]
    %s35 = scalar_lea.vmem %s1, 2
    %v36 = vld [vmem:[%s35] ss:$4 sm:$0x3]
    %v37 = vld [vmem:[%s1] ss:$4 sm:$0x3]
    %39 = vset.pattern.permute.xlu0 0
    %40 = vperm.xlu0 %39, %v34
    %v41 = vpop.permute.xlu0 %40
    %v44 = vlaneseq
    %v45 = vshrl.u32 %v44, 7
    %v46 = vsub.s32 0, %v45
    %v47 = vrot.slane %v37, %v46
    %v48 = vlaneseq
    %v49 = vshrl.u32 %v48, 7
    %v50 = vsub.s32 1, %v49
    %v51 = vrot.slane %v37, %v50
    %v54 = vmul.f32 %v41, %v47
    %v55 = vmul.f32 %v41, %v51
    %v57 = vlaneseq
    %v58 = vshrl.u32 %v57, 7
    %v59 = vsub.s32 0, %v58
    %v60 = vrot.slane %v36, %v59
    %v61 = vlaneseq
    %v62 = vshrl.u32 %v61, 7
    %v63 = vsub.s32 1, %v62
    %v64 = vrot.slane %v36, %v63
    %v67 = vadd.f32 %v60, %v54
    %v68 = vadd.f32 %v64, %v55
    %s69 = scalar_lea.vmem %s1, 1
    %v70 = vld [vmem:[%s69] ss:$4 sm:$0x3]
    %71 = vset.pattern.permute.xlu0 1
    %72 = vperm.xlu0 %71, %v34
    %v73 = vpop.permute.xlu0 %72
    %v76 = vlaneseq
    %v77 = vshrl.u32 %v76, 7
    %v78 = vsub.s32 0, %v77
    %v79 = vrot.slane %v70, %v78
    %v80 = vlaneseq
    %v81 = vshrl.u32 %v80, 7
    %v82 = vsub.s32 1, %v81
    %v83 = vrot.slane %v70, %v82
    %v86 = vmul.f32 %v73, %v79
    %v87 = vmul.f32 %v73, %v83
    %v88 = vadd.f32 %v67, %v86
    %v89 = vadd.f32 %v68, %v87
    %v90 = vmax.f32 %v88, 0.0
    %v91 = vmax.f32 %v89, 0.0
    %v92 = vld [vmem:[#allocation2] sm:$0xff]
    %v93 = vld [vmem:[#allocation2 + $0x8] sm:$0xff]
    %v94 = vld [vmem:[#allocation2 + $0x10] sm:$0xff]
    %v95 = vld [vmem:[#allocation2 + $0x18] sm:$0xff]
    %v96 = vld [vmem:[#allocation2 + $0x20] sm:$0xff]
    %v97 = vld [vmem:[#allocation2 + $0x28] sm:$0xff]
    %v98 = vld [vmem:[#allocation2 + $0x30] sm:$0xff]
    %v99 = vld [vmem:[#allocation2 + $0x38] sm:$0xff]
    %v100 = vld [vmem:[#allocation2 + $0x40] sm:$0xff]
    %v101 = vld [vmem:[#allocation2 + $0x48] sm:$0xff]
    %v102 = vld [vmem:[#allocation2 + $0x50] sm:$0xff]
    %v103 = vld [vmem:[#allocation2 + $0x58] sm:$0xff]
    %v104 = vld [vmem:[#allocation2 + $0x60] sm:$0xff]
    %v105 = vld [vmem:[#allocation2 + $0x68] sm:$0xff]
    %v106 = vld [vmem:[#allocation2 + $0x70] sm:$0xff]
    %v107 = vld [vmem:[#allocation2 + $0x78] sm:$0xff]
    %v108 = vld [vmem:[#allocation2 + $0x80] sm:$0xff]
    %v109 = vld [vmem:[#allocation2 + $0x88] sm:$0xff]
    %v110 = vld [vmem:[#allocation2 + $0x90] sm:$0xff]
    %v111 = vld [vmem:[#allocation2 + $0x98] sm:$0xff]
    %v112 = vld [vmem:[#allocation2 + $0xa0] sm:$0xff]
    %v113 = vld [vmem:[#allocation2 + $0xa8] sm:$0xff]
    %v114 = vld [vmem:[#allocation2 + $0xb0] sm:$0xff]
    %v115 = vld [vmem:[#allocation2 + $0xb8] sm:$0xff]
    %v116 = vld [vmem:[#allocation2 + $0xc0] sm:$0xff]
    %v117 = vld [vmem:[#allocation2 + $0xc8] sm:$0xff]
    %v118 = vld [vmem:[#allocation2 + $0xd0] sm:$0xff]
    %v119 = vld [vmem:[#allocation2 + $0xd8] sm:$0xff]
    %v120 = vld [vmem:[#allocation2 + $0xe0] sm:$0xff]
    %v121 = vld [vmem:[#allocation2 + $0xe8] sm:$0xff]
    %v122 = vld [vmem:[#allocation2 + $0xf0] sm:$0xff]
    %v123 = vld [vmem:[#allocation2 + $0xf8] sm:$0xff]
    %v124 = vld [vmem:[#allocation2 + $0x100] sm:$0xff]
    %v125 = vld [vmem:[#allocation2 + $0x108] sm:$0xff]
    %v126 = vld [vmem:[#allocation2 + $0x110] sm:$0xff]
    %v127 = vld [vmem:[#allocation2 + $0x118] sm:$0xff]
    %v128 = vld [vmem:[#allocation2 + $0x120] sm:$0xff]
    %v129 = vld [vmem:[#allocation2 + $0x128] sm:$0xff]
    %v130 = vld [vmem:[#allocation2 + $0x130] sm:$0xff]
    %v131 = vld [vmem:[#allocation2 + $0x138] sm:$0xff]
    %v132 = vld [vmem:[#allocation2 + $0x140] sm:$0xff]
    %v133 = vld [vmem:[#allocation2 + $0x148] sm:$0xff]
    %v134 = vld [vmem:[#allocation2 + $0x150] sm:$0xff]
    %v135 = vld [vmem:[#allocation2 + $0x158] sm:$0xff]
    %v136 = vld [vmem:[#allocation2 + $0x160] sm:$0xff]
    %v137 = vld [vmem:[#allocation2 + $0x168] sm:$0xff]
    %v138 = vld [vmem:[#allocation2 + $0x170] sm:$0xff]
    %v139 = vld [vmem:[#allocation2 + $0x178] sm:$0xff]
    %v140 = vld [vmem:[#allocation2 + $0x180] sm:$0xff]
    %v141 = vld [vmem:[#allocation2 + $0x188] sm:$0xff]
    %v142 = vld [vmem:[#allocation2 + $0x190] sm:$0xff]
    %v143 = vld [vmem:[#allocation2 + $0x198] sm:$0xff]
    %v144 = vld [vmem:[#allocation2 + $0x1a0] sm:$0xff]
    %v145 = vld [vmem:[#allocation2 + $0x1a8] sm:$0xff]
    %v146 = vld [vmem:[#allocation2 + $0x1b0] sm:$0xff]
    %v147 = vld [vmem:[#allocation2 + $0x1b8] sm:$0xff]
    %v148 = vld [vmem:[#allocation2 + $0x1c0] sm:$0xff]
    %v149 = vld [vmem:[#allocation2 + $0x1c8] sm:$0xff]
    %v150 = vld [vmem:[#allocation2 + $0x1d0] sm:$0xff]
    %v151 = vld [vmem:[#allocation2 + $0x1d8] sm:$0xff]
    %v152 = vld [vmem:[#allocation2 + $0x1e0] sm:$0xff]
    %v153 = vld [vmem:[#allocation2 + $0x1e8] sm:$0xff]
    %v154 = vld [vmem:[#allocation2 + $0x1f0] sm:$0xff]
    %v155 = vld [vmem:[#allocation2 + $0x1f8] sm:$0xff]
    %v156 = vld [vmem:[%s4] ss:$2 sm:$0x3]
    %v158 = vlaneseq
    %v159 = vshrl.u32 %v158, 7
    %v160 = vsub.s32 0, %v159
    %v161 = vrot.slane %v156, %v160
    %v162 = vlaneseq
    %v163 = vshrl.u32 %v162, 7
    %v164 = vsub.s32 1, %v163
    %v165 = vrot.slane %v156, %v164
    %168 = vmatprep.subr.mxu0 %v123
    %169 = vmatpush1.msra.mxu0 %v122
    %170 = vmatprep.subr.mxu0 %v121
    %171 = vmatpush1.msra.mxu0 %v120
    %172 = vmatprep.subr.mxu0 %v119
    %173 = vmatpush1.msra.mxu0 %v118
    %174 = vmatprep.subr.mxu0 %v117
    %175 = vmatpush1.msra.mxu0 %v116
    %176 = vmatprep.subr.mxu0 %v115
    %177 = vmatpush1.msra.mxu0 %v114
    %178 = vmatprep.subr.mxu0 %v113
    %179 = vmatpush1.msra.mxu0 %v112
    %180 = vmatprep.subr.mxu0 %v111
    %181 = vmatpush1.msra.mxu0 %v110
    %182 = vmatprep.subr.mxu0 %v109
    %183 = vmatpush1.msra.mxu0 %v108
    %184 = vmatprep.subr.mxu0 %v107
    %185 = vmatpush1.msra.mxu0 %v106
    %186 = vmatprep.subr.mxu0 %v105
    %187 = vmatpush1.msra.mxu0 %v104
    %188 = vmatprep.subr.mxu0 %v103
    %189 = vmatpush1.msra.mxu0 %v102
    %190 = vmatprep.subr.mxu0 %v101
    %191 = vmatpush1.msra.mxu0 %v100
    %192 = vmatprep.subr.mxu0 %v99
    %193 = vmatpush1.msra.mxu0 %v98
    %194 = vmatprep.subr.mxu0 %v97
    %195 = vmatpush1.msra.mxu0 %v96
    %196 = vmatprep.subr.mxu0 %v95
    %197 = vmatpush1.msra.mxu0 %v94
    %198 = vmatprep.subr.mxu0 %v93
    %199 = vmatpush1.msra.mxu0 %v92
    %200 = vmatprep.subr.mxu0 %v155
    %201 = vmatpush2.msra.mxu0 %v154
    %202 = vmatprep.subr.mxu0 %v153
    %203 = vmatpush2.msra.mxu0 %v152
    %204 = vmatprep.subr.mxu0 %v151
    %205 = vmatpush2.msra.mxu0 %v150
    %206 = vmatprep.subr.mxu0 %v149
    %207 = vmatpush2.msra.mxu0 %v148
    %208 = vmatprep.subr.mxu0 %v147
    %209 = vmatpush2.msra.mxu0 %v146
    %210 = vmatprep.subr.mxu0 %v145
    %211 = vmatpush2.msra.mxu0 %v144
    %212 = vmatprep.subr.mxu0 %v143
    %213 = vmatpush2.msra.mxu0 %v142
    %214 = vmatprep.subr.mxu0 %v141
    %215 = vmatpush2.msra.mxu0 %v140
    %216 = vmatprep.subr.mxu0 %v139
    %217 = vmatpush2.msra.mxu0 %v138
    %218 = vmatprep.subr.mxu0 %v137
    %219 = vmatpush2.msra.mxu0 %v136
    %220 = vmatprep.subr.mxu0 %v135
    %221 = vmatpush2.msra.mxu0 %v134
    %222 = vmatprep.subr.mxu0 %v133
    %223 = vmatpush2.msra.mxu0 %v132
    %224 = vmatprep.subr.mxu0 %v131
    %225 = vmatpush2.msra.mxu0 %v130
    %226 = vmatprep.subr.mxu0 %v129
    %227 = vmatpush2.msra.mxu0 %v128
    %228 = vmatprep.subr.mxu0 %v127
    %229 = vmatpush2.msra.mxu0 %v126
    %230 = vmatprep.subr.mxu0 %v125
    %231 = vmatpush2.msra.mxu0 %v124
    %232 = vmatprep.mubr.f32.mxu0 %v91
    %233 = vmatmul.mubr.f32.gmra.mxu0 %v90
    %v234 = vpop.f32.mrf.mxu0
    %v235 = vadd.f32 %v161, %v234
    %v236 = vpop.f32.mrf.mxu0
    %v237 = vadd.f32 %v165, %v236
    %238 = vdwg.mxu0
    %v239 = vmax.f32 %v235, 0.0
    %v240 = vmax.f32 %v237, 0.0
    %v241 = vld [vmem:[%s3] sm:$0xff]
    %v242 = vld [vmem:[%s3 + $0x8] sm:$0xff]
    %v243 = vld [vmem:[%s3 + $0x10] sm:$0xff]
    %v244 = vld [vmem:[%s3 + $0x18] sm:$0xff]
    %v245 = vld [vmem:[%s3 + $0x20] sm:$0xff]
    %v246 = vld [vmem:[%s3 + $0x28] sm:$0xff]
    %v247 = vld [vmem:[%s3 + $0x30] sm:$0xff]
    %v248 = vld [vmem:[%s3 + $0x38] sm:$0xff]
    %v249 = vld [vmem:[%s3 + $0x40] sm:$0xff]
    %v250 = vld [vmem:[%s3 + $0x48] sm:$0xff]
    %v251 = vld [vmem:[%s3 + $0x50] sm:$0xff]
    %v252 = vld [vmem:[%s3 + $0x58] sm:$0xff]
    %v253 = vld [vmem:[%s3 + $0x60] sm:$0xff]
    %v254 = vld [vmem:[%s3 + $0x68] sm:$0xff]
    %v255 = vld [vmem:[%s3 + $0x70] sm:$0xff]
    %v256 = vld [vmem:[%s3 + $0x78] sm:$0xff]
    %v257 = vld [vmem:[%s3 + $0x80] sm:$0xff]
    %v258 = vld [vmem:[%s3 + $0x88] sm:$0xff]
    %v259 = vld [vmem:[%s3 + $0x90] sm:$0xff]
    %v260 = vld [vmem:[%s3 + $0x98] sm:$0xff]
    %v261 = vld [vmem:[%s3 + $0xa0] sm:$0xff]
    %v262 = vld [vmem:[%s3 + $0xa8] sm:$0xff]
    %v263 = vld [vmem:[%s3 + $0xb0] sm:$0xff]
    %v264 = vld [vmem:[%s3 + $0xb8] sm:$0xff]
    %v265 = vld [vmem:[%s3 + $0xc0] sm:$0xff]
    %v266 = vld [vmem:[%s3 + $0xc8] sm:$0xff]
    %v267 = vld [vmem:[%s3 + $0xd0] sm:$0xff]
    %v268 = vld [vmem:[%s3 + $0xd8] sm:$0xff]
    %v269 = vld [vmem:[%s3 + $0xe0] sm:$0xff]
    %v270 = vld [vmem:[%s3 + $0xe8] sm:$0xff]
    %v271 = vld [vmem:[%s3 + $0xf0] sm:$0xff]
    %v272 = vld [vmem:[%s3 + $0xf8] sm:$0xff]
    %v273 = vld [vmem:[%s4 + $0x1] sm:$0x1]
    %v274 = vlaneseq
    %v275 = vshrl.u32 %v274, 7
    %v276 = vsub.s32 0, %v275
    %v277 = vrot.slane %v273, %v276
    %278 = vmatprep.subr.mxu0 0.0
    %279 = vmatpush1.msra.mxu0 %v256
    %280 = vmatprep.subr.mxu0 0.0
    %281 = vmatpush1.msra.mxu0 %v255
    %282 = vmatprep.subr.mxu0 0.0
    %283 = vmatpush1.msra.mxu0 %v254
    %284 = vmatprep.subr.mxu0 0.0
    %285 = vmatpush1.msra.mxu0 %v253
    %286 = vmatprep.subr.mxu0 0.0
    %287 = vmatpush1.msra.mxu0 %v252
    %288 = vmatprep.subr.mxu0 0.0
    %289 = vmatpush1.msra.mxu0 %v251
    %290 = vmatprep.subr.mxu0 0.0
    %291 = vmatpush1.msra.mxu0 %v250
    %292 = vmatprep.subr.mxu0 0.0
    %293 = vmatpush1.msra.mxu0 %v249
    %294 = vmatprep.subr.mxu0 0.0
    %295 = vmatpush1.msra.mxu0 %v248
    %296 = vmatprep.subr.mxu0 0.0
    %297 = vmatpush1.msra.mxu0 %v247
    %298 = vmatprep.subr.mxu0 0.0
    %299 = vmatpush1.msra.mxu0 %v246
    %300 = vmatprep.subr.mxu0 0.0
    %301 = vmatpush1.msra.mxu0 %v245
    %302 = vmatprep.subr.mxu0 0.0
    %303 = vmatpush1.msra.mxu0 %v244
    %304 = vmatprep.subr.mxu0 0.0
    %305 = vmatpush1.msra.mxu0 %v243
    %306 = vmatprep.subr.mxu0 0.0
    %307 = vmatpush1.msra.mxu0 %v242
    %308 = vmatprep.subr.mxu0 0.0
    %309 = vmatpush1.msra.mxu0 %v241
    %310 = vmatprep.subr.mxu0 0.0
    %311 = vmatpush2.msra.mxu0 %v272
    %312 = vmatprep.subr.mxu0 0.0
    %313 = vmatpush2.msra.mxu0 %v271
    %314 = vmatprep.subr.mxu0 0.0
    %315 = vmatpush2.msra.mxu0 %v270
    %316 = vmatprep.subr.mxu0 0.0
    %317 = vmatpush2.msra.mxu0 %v269
    %318 = vmatprep.subr.mxu0 0.0
    %319 = vmatpush2.msra.mxu0 %v268
    %320 = vmatprep.subr.mxu0 0.0
    %321 = vmatpush2.msra.mxu0 %v267
    %322 = vmatprep.subr.mxu0 0.0
    %323 = vmatpush2.msra.mxu0 %v266
    %324 = vmatprep.subr.mxu0 0.0
    %325 = vmatpush2.msra.mxu0 %v265
    %326 = vmatprep.subr.mxu0 0.0
    %327 = vmatpush2.msra.mxu0 %v264
    %328 = vmatprep.subr.mxu0 0.0
    %329 = vmatpush2.msra.mxu0 %v263
    %330 = vmatprep.subr.mxu0 0.0
    %331 = vmatpush2.msra.mxu0 %v262
    %332 = vmatprep.subr.mxu0 0.0
    %333 = vmatpush2.msra.mxu0 %v261
    %334 = vmatprep.subr.mxu0 0.0
    %335 = vmatpush2.msra.mxu0 %v260
    %336 = vmatprep.subr.mxu0 0.0
    %337 = vmatpush2.msra.mxu0 %v259
    %338 = vmatprep.subr.mxu0 0.0
    %339 = vmatpush2.msra.mxu0 %v258
    %340 = vmatprep.subr.mxu0 0.0
    %341 = vmatpush2.msra.mxu0 %v257
    %342 = vmatprep.mubr.f32.mxu0 %v240
    %343 = vmatmul.mubr.f32.gmra.mxu0 %v239
    %v344 = vpop.f32.mrf.mxu0
    %v345 = vadd.f32 %v277, %v344
    %v346 = vpop.f32.mrf.mxu0
    %347 = vdwg.mxu0
    %vm348 = vcmask 15360
    %v349 = vsel %vm348, %v345, -inf
    %350 = vmax.xlane.f32.xlu0 %v349
    %v351 = vpop.xlane.xlu0 %350
    %v352 = vsub.f32 %v345, %v351
    %v353 = vmul.f32 %v352, 1.442695
    %v354 = vpow.pop %v353
    %v355 = vsel %vm348, %v354, 0.0
    %356 = vadd.xlane.f32.xlu0 %v355
    %v357 = vpop.xlane.xlu0 %356
    %v358 = vrcp.pop %v357
    %v359 = vmul.f32 %v354, %v358
    %360 = vst.msk [vmem:[%s5] sm:$0xff] %vm348, %v359
    // Predicated region
    $region26: #{tpu_custom_call.1} parent=1 // pred_check
      _
    $region27: #{tpu_custom_call.1} parent=1 // pred_check_branch
      %362 = sbr.rel (0) target = $region29
    $region28: #{tpu_custom_call.1} parent=1 // pred_region
      _
    $region29: #{tpu_custom_call.1} parent=1 // pred_fallthru
      _
    // Predicated region
    $region30: #{tpu_custom_call.1} parent=1 // pred_check
      _
    $region31: #{tpu_custom_call.1} parent=1 // pred_check_branch
      %364 = sbr.rel (0) target = $region33
    $region32: #{tpu_custom_call.1} parent=1 // pred_region
      _
    $region33: #{tpu_custom_call.1} parent=1 // pred_fallthru
      _
    %365 = vsyncpa [#allocation3], 1

</llo_original>
